<compile_context>
chip_gen: v6e
topology: v6e:2x2x1
jax: 0.10.0
libtpu: 0.0.40
codegen_flags: <defaults>
</compile_context>

<pallas_src>
import functools

import jax
import jax.numpy as jnp
from jax.experimental import pallas as pl
from jax.experimental.pallas import tpu as pltpu


def _cdiv(a, b):
    return (a + b - 1) // b


def _round_up(x, m):
    return ((x + m - 1) // m) * m


def _default_vmem_limit():
    # v5e/v6e: 128 MiB physical -> 96 MiB scoped; v7x: 64 MiB physical -> 48 MiB.
    try:
        cap = pltpu.get_tpu_info().vmem_capacity_bytes
    except Exception:
        cap = 64 * 1024 * 1024
    return min(int(cap * 3 // 4), 96 * 1024 * 1024)


def _label_smoothing_kernel(pred_ref, tgt_ref, out_ref,
                            m_ref, l_ref, acc_ref,
                            *, class_tile, tail_len, confidence, eps):
    # pred_ref: (TB, TC) logits (native dtype), tgt_ref: (TB, 1) int32
    # out_ref : (TB, 1) f32 per-row loss (written at the last class step)
    # scratch : (TB, 1) f32 each — running max, running sum-exp, fused weighted-logit acc
    k = pl.program_id(1)
    nk = pl.num_programs(1)

    @pl.when(k == 0)
    def _init():
        m_ref[...] = jnp.full_like(m_ref, -1e30)   # -1e30 (not -inf) avoids inf-inf NaNs
        l_ref[...] = jnp.zeros_like(l_ref)
        acc_ref[...] = jnp.zeros_like(acc_ref)

    x = pred_ref[...].astype(jnp.float32)                       # upcast per tile, f32 math
    tgt_local = tgt_ref[...] - k * class_tile                   # (TB,1) target col within tile
    iota = jax.lax.broadcasted_iota(jnp.int32, x.shape, 1)      # local lane index (no +k*TC)

    def _step(xm, xs):
        # online logsumexp over the class axis
        tile_max = jnp.max(xm, axis=-1, keepdims=True)
        m_old = m_ref[...]
        m_new = jnp.maximum(m_old, tile_max)
        l_ref[...] = (l_ref[...] * jnp.exp(m_old - m_new)
                      + jnp.sum(jnp.exp(xm - m_new), axis=-1, keepdims=True))
        m_ref[...] = m_new
        # fused smoothed-weight accumulator (no logp / one-hot materialized):
        #   acc += eps * sum_c x_c + (confidence - eps) * x_target
        x_t = jnp.sum(jnp.where(iota == tgt_local, xs, 0.0), axis=-1, keepdims=True)
        acc_ref[...] += (jnp.float32(eps) * jnp.sum(xs, axis=-1, keepdims=True)
                         + jnp.float32(confidence - eps) * x_t)

    if tail_len is None:
        # class axis divides evenly (or single full-extent block): no masking anywhere
        _step(x, x)
    else:
        # only the LAST class tile overhangs the array; its tail lanes are garbage
        @pl.when(k < nk - 1)
        def _full():
            _step(x, x)

        @pl.when(k == nk - 1)
        def _tail():
            valid = iota < tail_len
            _step(jnp.where(valid, x, jnp.float32(-1e30)),   # excluded from max / exp
                  jnp.where(valid, x, jnp.float32(0.0)))     # excluded from sums

    @pl.when(k == nk - 1)
    def _finalize():
        # loss_row = LSE - (confidence - eps) * x_target - eps * sum_c x_c
        out_ref[...] = m_ref[...] + jnp.log(l_ref[...]) - acc_ref[...]


def label_smoothing_loss(predictions, targets, *, num_classes=None, smoothing=0.1,
                         batch_tile=None, class_tile=2048, interpret=False):
    """mean_b( sum_c( -smooth_targets * log_softmax(predictions) ) )."""
    B, C = predictions.shape
    if num_classes is None:
        num_classes = C
    assert num_classes == C, "num_classes must match predictions.shape[1]"
    confidence = 1.0 - smoothing
    eps = smoothing / (num_classes - 1)

    # ---- batch tiling: >=2 tiles when possible (v7x megacore), balanced remainder ----
    if batch_tile is None:
        if B < 16:
            TB = B                                   # single full-extent block
        else:
            n_b = max(2, _cdiv(B, 512))              # <=512 rows per tile
            TB = _round_up(_cdiv(B, n_b), 8)
    else:
        TB = min(batch_tile, B)
        if TB != B:
            TB = _round_up(TB, 8)
        if TB >= B:
            TB = B
    grid_b = _cdiv(B, TB)

    # ---- class tiling: balanced remainder, multiple of 128 (or full extent) ----
    if C <= class_tile:
        TC = C                                       # full-extent block, no tail masking
        grid_c = 1
        tail_len = None
    else:
        n_c = _cdiv(C, class_tile)                   # balance tail across tiles
        TC = _round_up(_cdiv(C, n_c), 128)
        grid_c = _cdiv(C, TC)
        tail = C - (grid_c - 1) * TC
        tail_len = None if tail == TC else tail

    tgt = targets.astype(jnp.int32).reshape(B, 1)

    kernel = functools.partial(
        _label_smoothing_kernel,
        class_tile=TC, tail_len=tail_len, confidence=confidence, eps=eps)

    itemsize = jnp.dtype(predictions.dtype).itemsize
    cost = pl.CostEstimate(
        flops=5 * B * C,
        transcendentals=B * C,
        bytes_accessed=B * C * itemsize + 2 * B * 4)

    row_loss = pl.pallas_call(
        kernel,
        out_shape=jax.ShapeDtypeStruct((B, 1), jnp.float32),
        grid_spec=pltpu.PrefetchScalarGridSpec(
            num_scalar_prefetch=0,
            grid=(grid_b, grid_c),
            in_specs=[
                pl.BlockSpec((TB, TC), lambda i, k: (i, k)),   # streamed logits tile
                pl.BlockSpec((TB, 1), lambda i, k: (i, 0)),    # targets, resident per batch tile
            ],
            out_specs=pl.BlockSpec((TB, 1), lambda i, k: (i, 0)),
            scratch_shapes=[pltpu.VMEM((TB, 1), jnp.float32)] * 3,
        ),
        compiler_params=pltpu.CompilerParams(
            dimension_semantics=("parallel", "arbitrary"),
            vmem_limit_bytes=_default_vmem_limit(),
        ),
        cost_estimate=cost,
        interpret=interpret,
    )(predictions, tgt)

    # Tiny final mean in the wrapper (a few hundred floats at most).
    return jnp.mean(row_loss[:, 0])


def _reference(predictions, targets, num_classes, smoothing):
    logp = jax.nn.log_softmax(predictions.astype(jnp.float32), axis=1)
    eps = smoothing / (num_classes - 1)
    confidence = 1.0 - smoothing
    smooth = jnp.full_like(logp, eps)
    smooth = smooth.at[jnp.arange(predictions.shape[0]), targets].set(confidence)
    return jnp.mean(jnp.sum(-smooth * logp, axis=1))


if __name__ == "__main__":
    key = jax.random.PRNGKey(0)
    k1, k2, k3, k4, k5, k6 = jax.random.split(key, 6)
    smoothing = 0.1

    # 1) Tiny dense case (single full-extent blocks): batch=8, num_classes=32.
    B, C = 8, 32
    predictions = jax.random.normal(k1, (B, C), dtype=jnp.float32)
    targets = jax.random.randint(k2, (B,), 0, C, dtype=jnp.int32)
    loss = label_smoothing_loss(predictions, targets, smoothing=smoothing)
    jax.block_until_ready(loss)
    ref = _reference(predictions, targets, C, smoothing)
    assert jnp.allclose(loss, ref, atol=1e-5, rtol=1e-5), (loss, ref)

    # 2) bf16 logits + ragged class axis (boundary block + masked tail class tile).
    B2, C2 = 12, 160
    predictions2 = jax.random.normal(k3, (B2, C2)).astype(jnp.bfloat16)
    targets2 = jax.random.randint(k4, (B2,), 0, C2, dtype=jnp.int32)
    loss2 = label_smoothing_loss(predictions2, targets2, smoothing=smoothing,
                                 class_tile=128)
    jax.block_until_ready(loss2)
    ref2 = _reference(predictions2, targets2, C2, smoothing)
    assert jnp.allclose(loss2, ref2, atol=2e-3, rtol=2e-3), (loss2, ref2)

    # 3) Ragged batch AND class axes — no wrapper padding anywhere.
    B3, C3 = 20, 300
    predictions3 = jax.random.normal(k5, (B3, C3), dtype=jnp.float32)
    targets3 = jax.random.randint(k6, (B3,), 0, C3, dtype=jnp.int32)
    loss3 = label_smoothing_loss(predictions3, targets3, smoothing=smoothing,
                                 class_tile=128)
    jax.block_until_ready(loss3)
    ref3 = _reference(predictions3, targets3, C3, smoothing)
    assert jnp.allclose(loss3, ref3, atol=1e-5, rtol=1e-5), (loss3, ref3)

    print("KERNEL_OK")
</pallas_src>

<mosaic_0001>
module attributes {stable_mosaic.version = 11 : i64} {
  func.func @_label_smoothing_kernel(%arg0: i32, %arg1: i32, %arg2: memref<8x32xf32, #tpu.memory_space<vmem>>, %arg3: memref<8x1xi32, #tpu.memory_space<vmem>>, %arg4: memref<8x1xf32, #tpu.memory_space<vmem>>, %arg5: memref<8x1xf32, #tpu.memory_space<vmem>>, %arg6: memref<8x1xf32, #tpu.memory_space<vmem>>, %arg7: memref<8x1xf32, #tpu.memory_space<vmem>>) attributes {dimension_semantics = [#tpu.dimension_semantics<parallel>, #tpu.dimension_semantics<arbitrary>], iteration_bounds = array<i64: 1, 1>, scalar_prefetch = 0 : i64, scratch_operands = 3 : i64, tpu.core_type = #tpu.core_type<tc>, window_params = [{transform_indices = @transform_0, window_bounds = array<i64: 8, 32>}, {transform_indices = @transform_1, window_bounds = array<i64: 8, 1>}, {transform_indices = @transform_2, window_bounds = array<i64: 8, 1>}]} {
    %c0_i32 = arith.constant 0 : i32
    %0 = arith.cmpi eq, %arg1, %c0_i32 : i32
    %1 = arith.extui %0 : i1 to i32
    %c0_i32_0 = arith.constant 0 : i32
    %2 = arith.cmpi ne, %1, %c0_i32_0 : i32
    scf.if %2 {
      %cst_24 = arith.constant -1.000000e+30 : f32
      %44 = vector.broadcast %cst_24 : f32 to vector<8x1xf32>
      %c0_25 = arith.constant 0 : index
      %c0_26 = arith.constant 0 : index
      %45 = vector.load %arg5[%c0_25, %c0_26] : memref<8x1xf32, #tpu.memory_space<vmem>>, vector<8x1xf32>
      tpu.vector_store %arg5[%c0_25, %c0_26], %44 {strides = array<i32>} : memref<8x1xf32, #tpu.memory_space<vmem>>, vector<8x1xf32>,
      %cst_27 = arith.constant 0.000000e+00 : f32
      %46 = vector.broadcast %cst_27 : f32 to vector<8x1xf32>
      %c0_28 = arith.constant 0 : index
      %c0_29 = arith.constant 0 : index
      %47 = vector.load %arg6[%c0_28, %c0_29] : memref<8x1xf32, #tpu.memory_space<vmem>>, vector<8x1xf32>
      tpu.vector_store %arg6[%c0_28, %c0_29], %46 {strides = array<i32>} : memref<8x1xf32, #tpu.memory_space<vmem>>, vector<8x1xf32>,
      %cst_30 = arith.constant 0.000000e+00 : f32
      %48 = vector.broadcast %cst_30 : f32 to vector<8x1xf32>
      %c0_31 = arith.constant 0 : index
      %c0_32 = arith.constant 0 : index
      %49 = vector.load %arg7[%c0_31, %c0_32] : memref<8x1xf32, #tpu.memory_space<vmem>>, vector<8x1xf32>
      tpu.vector_store %arg7[%c0_31, %c0_32], %48 {strides = array<i32>} : memref<8x1xf32, #tpu.memory_space<vmem>>, vector<8x1xf32>,
    } else {
    }
    %c0 = arith.constant 0 : index
    %c0_1 = arith.constant 0 : index
    %3 = vector.load %arg2[%c0, %c0_1] : memref<8x32xf32, #tpu.memory_space<vmem>>, vector<8x32xf32>
    %c0_2 = arith.constant 0 : index
    %c0_3 = arith.constant 0 : index
    %4 = vector.load %arg3[%c0_2, %c0_3] : memref<8x1xi32, #tpu.memory_space<vmem>>, vector<8x1xi32>
    %c32_i32 = arith.constant 32 : i32
    %5 = arith.muli %arg1, %c32_i32 : i32
    %6 = vector.broadcast %5 : i32 to vector<8x1xi32>
    %7 = arith.subi %4, %6 : vector<8x1xi32>
    %8 = tpu.iota {dimensions = array<i32: 1>} : vector<8x32xi32>
    %cst = arith.constant dense<0xFF800000> : vector<8xf32>
    %9 = vector.multi_reduction <maximumf>, %3, %cst [1] : vector<8x32xf32> to vector<8xf32>
    %10 = vector.shape_cast %9 : vector<8xf32> to vector<8x1xf32>
    %c0_4 = arith.constant 0 : index
    %c0_5 = arith.constant 0 : index
    %11 = vector.load %arg5[%c0_4, %c0_5] : memref<8x1xf32, #tpu.memory_space<vmem>>, vector<8x1xf32>
    %12 = arith.maximumf %11, %10 : vector<8x1xf32>
    %c0_6 = arith.constant 0 : index
    %c0_7 = arith.constant 0 : index
    %13 = vector.load %arg6[%c0_6, %c0_7] : memref<8x1xf32, #tpu.memory_space<vmem>>, vector<8x1xf32>
    %14 = arith.subf %11, %12 : vector<8x1xf32>
    %15 = math.exp %14 : vector<8x1xf32>
    %16 = arith.mulf %13, %15 : vector<8x1xf32>
    %17 = vector.broadcast %12 : vector<8x1xf32> to vector<8x32xf32>
    %18 = arith.subf %3, %17 : vector<8x32xf32>
    %19 = math.exp %18 : vector<8x32xf32>
    %cst_8 = arith.constant dense<0.000000e+00> : vector<8xf32>
    %20 = vector.multi_reduction <add>, %19, %cst_8 [1] : vector<8x32xf32> to vector<8xf32>
    %21 = vector.shape_cast %20 : vector<8xf32> to vector<8x1xf32>
    %22 = arith.addf %16, %21 : vector<8x1xf32>
    %c0_9 = arith.constant 0 : index
    %c0_10 = arith.constant 0 : index
    %23 = vector.load %arg6[%c0_9, %c0_10] : memref<8x1xf32, #tpu.memory_space<vmem>>, vector<8x1xf32>
    tpu.vector_store %arg6[%c0_9, %c0_10], %22 {strides = array<i32>} : memref<8x1xf32, #tpu.memory_space<vmem>>, vector<8x1xf32>,
    %c0_11 = arith.constant 0 : index
    %c0_12 = arith.constant 0 : index
    %24 = vector.load %arg5[%c0_11, %c0_12] : memref<8x1xf32, #tpu.memory_space<vmem>>, vector<8x1xf32>
    tpu.vector_store %arg5[%c0_11, %c0_12], %12 {strides = array<i32>} : memref<8x1xf32, #tpu.memory_space<vmem>>, vector<8x1xf32>,
    %25 = vector.broadcast %7 : vector<8x1xi32> to vector<8x32xi32>
    %26 = arith.cmpi eq, %8, %25 : vector<8x32xi32>
    %cst_13 = arith.constant 0.000000e+00 : f32
    %27 = vector.broadcast %cst_13 : f32 to vector<8x32xf32>
    %28 = arith.select %26, %3, %27 : vector<8x32xi1>, vector<8x32xf32>
    %cst_14 = arith.constant dense<0.000000e+00> : vector<8xf32>
    %29 = vector.multi_reduction <add>, %28, %cst_14 [1] : vector<8x32xf32> to vector<8xf32>
    %30 = vector.shape_cast %29 : vector<8xf32> to vector<8x1xf32>
    %c0_15 = arith.constant 0 : index
    %c0_16 = arith.constant 0 : index
    %31 = vector.load %arg7[%c0_15, %c0_16] : memref<8x1xf32, #tpu.memory_space<vmem>>, vector<8x1xf32>
    %cst_17 = arith.constant dense<0.000000e+00> : vector<8xf32>
    %32 = vector.multi_reduction <add>, %3, %cst_17 [1] : vector<8x32xf32> to vector<8xf32>
    %33 = vector.shape_cast %32 : vector<8xf32> to vector<8x1xf32>
    %cst_18 = arith.constant 0.0032258064 : f32
    %34 = vector.broadcast %cst_18 : f32 to vector<8x1xf32>
    %35 = arith.mulf %34, %33 : vector<8x1xf32>
    %cst_19 = arith.constant 0.896774172 : f32
    %36 = vector.broadcast %cst_19 : f32 to vector<8x1xf32>
    %37 = arith.mulf %36, %30 : vector<8x1xf32>
    %38 = arith.addf %35, %37 : vector<8x1xf32>
    %39 = arith.addf %31, %38 : vector<8x1xf32>
    %c0_20 = arith.constant 0 : index
    %c0_21 = arith.constant 0 : index
    %40 = vector.load %arg7[%c0_20, %c0_21] : memref<8x1xf32, #tpu.memory_space<vmem>>, vector<8x1xf32>
    tpu.vector_store %arg7[%c0_20, %c0_21], %39 {strides = array<i32>} : memref<8x1xf32, #tpu.memory_space<vmem>>, vector<8x1xf32>,
    %c0_i32_22 = arith.constant 0 : i32
    %41 = arith.cmpi eq, %arg1, %c0_i32_22 : i32
    %42 = arith.extui %41 : i1 to i32
    %c0_i32_23 = arith.constant 0 : i32
    %43 = arith.cmpi ne, %42, %c0_i32_23 : i32
    scf.if %43 {
      %c0_24 = arith.constant 0 : index
      %c0_25 = arith.constant 0 : index
      %44 = vector.load %arg5[%c0_24, %c0_25] : memref<8x1xf32, #tpu.memory_space<vmem>>, vector<8x1xf32>
      %c0_26 = arith.constant 0 : index
      %c0_27 = arith.constant 0 : index
      %45 = vector.load %arg6[%c0_26, %c0_27] : memref<8x1xf32, #tpu.memory_space<vmem>>, vector<8x1xf32>
      %46 = math.log %45 : vector<8x1xf32>
      %47 = arith.addf %44, %46 : vector<8x1xf32>
      %c0_28 = arith.constant 0 : index
      %c0_29 = arith.constant 0 : index
      %48 = vector.load %arg7[%c0_28, %c0_29] : memref<8x1xf32, #tpu.memory_space<vmem>>, vector<8x1xf32>
      %49 = arith.subf %47, %48 : vector<8x1xf32>
      %c0_30 = arith.constant 0 : index
      %c0_31 = arith.constant 0 : index
      %50 = vector.load %arg4[%c0_30, %c0_31] : memref<8x1xf32, #tpu.memory_space<vmem>>, vector<8x1xf32>
      tpu.vector_store %arg4[%c0_30, %c0_31], %49 {strides = array<i32>} : memref<8x1xf32, #tpu.memory_space<vmem>>, vector<8x1xf32>,
    } else {
    }
    return
  }
  func.func @transform_0(%arg0: i32, %arg1: i32) -> (i32, i32) {
    %c0_i32 = arith.constant 0 : i32
    return %arg0, %arg1 : i32, i32
  }
  func.func @transform_1(%arg0: i32, %arg1: i32) -> (i32, i32) {
    %c0_i32 = arith.constant 0 : i32
    %c0_i32_0 = arith.constant 0 : i32
    return %arg0, %c0_i32 : i32, i32
  }
  func.func @transform_2(%arg0: i32, %arg1: i32) -> (i32, i32) {
    %c0_i32 = arith.constant 0 : i32
    %c0_i32_0 = arith.constant 0 : i32
    return %arg0, %c0_i32 : i32, i32
  }
}

</mosaic_0001>

<llo_original>
// kernel: tpu_custom_call.1
$region0: #{tpu_custom_call.1}
  #allocation0 [shape = 'u32[]', space=smem, size = 0x4, offset = 0x4, fixed_abs, tag = 'smem constant byte address 0x4 - core index']
  #allocation1 [shape = 'u32[144,128]{1,0:T(1,128)}', space=vmem, size = 0x12000, scoped, tag = 'internal scratch']
  #allocation2 [shape = 'f32[8,1]{1,0:T(8,128)}', space=vmem, size = 0x1000, scoped, tag = 'scratch operand']
  #allocation3 [shape = 'f32[8,1]{1,0:T(8,128)}', space=vmem, size = 0x1000, scoped, tag = 'scratch operand']
  #allocation4 [shape = 'f32[8,1]{1,0:T(8,128)}', space=vmem, size = 0x1000, scoped, tag = 'scratch operand']
  %s0 = inlined_call_operand.vmem [shape: f32[8,32], index: 0, kind: input, shape index: {}]
  %s1 = inlined_call_operand.vmem [shape: s32[8,1], index: 1, kind: input, shape index: {}]
  %s2 = inlined_call_operand.vmem [shape: f32[8,1], index: 2, kind: output, shape index: {}]
  %s3 = sld [smem:[#allocation0]]
  $region26: #{tpu_custom_call.1} parent=0
    _
  %s5 = ssub.s32 1, %s3
  %s6 = scalar_select 0, %s5, %s3
  // Predicated region
  $region2: #{tpu_custom_call.1} parent=0 // pred_check
    _
  $region3: #{tpu_custom_call.1} parent=0 // pred_check_branch
    %8 = sbr.rel (0) target = $region5
  $region4: #{tpu_custom_call.1} parent=0 // pred_region
    _
  $region5: #{tpu_custom_call.1} parent=0 // pred_fallthru
    _
  // Predicated region
  $region6: #{tpu_custom_call.1} parent=0 // pred_check
    _
  $region7: #{tpu_custom_call.1} parent=0 // pred_check_branch
    %10 = sbr.rel (0) target = $region9
  $region8: #{tpu_custom_call.1} parent=0 // pred_region
    _
  $region9: #{tpu_custom_call.1} parent=0 // pred_fallthru
    _
  %p11 = scmp.eq.s32.totalorder 0, 0
  // Predicated region
  $region10: #{tpu_custom_call.1} parent=0 // pred_check
    %p12 = pneg %p11
  $region11: #{tpu_custom_call.1} parent=0 // pred_check_branch
    %14 = sbr.rel (%p12) target = $region13
  $region12: #{tpu_custom_call.1} parent=0 // pred_region
    %vm15 = vcmask 7168
    %16 = vst.msk [vmem:[#allocation2] sm:$0xff] %vm15, -1e+30
    %17 = vst.msk [vmem:[#allocation3] sm:$0xff] %vm15, 0.0
    %18 = vst.msk [vmem:[#allocation4] sm:$0xff] %vm15, 0.0
  $region13: #{tpu_custom_call.1} parent=0 // pred_fallthru
    _
  %v19 = vld [vmem:[%s0] sm:$0xff]
  %v20 = vld [vmem:[%s1] sm:$0xff]
  %s21 = smul.u32 0, 32
  %v22 = vstv %s21
  %v23 = vsub.s32 %v20, %v22
  %v24 = vlaneseq
  %v25 = vand.u32 %v24, 127
  %vm26 = vcmask 261120
  %v27 = vsel %vm26, %v19, -inf
  %28 = vmax.xlane.f32.xlu0 %v27
  %v29 = vpop.xlane.xlu0 %28
  %v30 = vld [vmem:[#allocation2] sm:$0xff]
  %v31 = vmax.f32 %v30, %v29
  %v32 = vld [vmem:[#allocation3] sm:$0xff]
  %v33 = vsub.f32 %v30, %v31
  %v34 = vmul.f32 %v33, 1.442695
  %v35 = vpow.pop %v34
  %v36 = vmul.f32 %v32, %v35
  %38 = vset.pattern.permute.xlu0 0
  %39 = vperm.xlu0 %38, %v31
  %v40 = vpop.permute.xlu0 %39
  %v42 = vsub.f32 %v19, %v40
  %v43 = vmul.f32 %v42, 1.442695
  %v44 = vpow.pop %v43
  %v45 = vsel %vm26, %v44, 0.0
  %46 = vadd.xlane.f32.xlu0 %v45
  %v47 = vpop.xlane.xlu0 %46
  %v48 = vadd.f32 %v36, %v47
  %vm49 = vcmask 7168
  %50 = vst.msk [vmem:[#allocation3] sm:$0xff] %vm49, %v48
  %51 = vst.msk [vmem:[#allocation2] sm:$0xff] %vm49, %v31
  %52 = vset.pattern.permute.xlu0 0
  %53 = vperm.xlu0 %52, %v23
  %v54 = vpop.permute.xlu0 %53
  %vm55 = vcmp.eq.s32.totalorder %v25, %v54
  %v56 = vsel %vm55, %v19, 0.0
  %v57 = vsel %vm26, %v56, 0.0
  %58 = vadd.xlane.f32.xlu0 %v57
  %v59 = vpop.xlane.xlu0 %58
  %v60 = vld [vmem:[#allocation4] sm:$0xff]
  %v61 = vsel %vm26, %v19, 0.0
  %62 = vadd.xlane.f32.xlu0 %v61
  %v63 = vpop.xlane.xlu0 %62
  %v64 = vmul.f32 %v63, 0.0032258064
  %v65 = vmul.f32 %v59, 0.8967742
  %v66 = vadd.f32 %v64, %v65
  %v67 = vadd.f32 %v60, %v66
  %68 = vst.msk [vmem:[#allocation4] sm:$0xff] %vm49, %v67
  // Predicated region
  $region14: #{tpu_custom_call.1} parent=0 // pred_check
    %p69 = pneg %p11
  $region15: #{tpu_custom_call.1} parent=0 // pred_check_branch
    %71 = sbr.rel (%p69) target = $region17
  $region16: #{tpu_custom_call.1} parent=0 // pred_region
    %v72 = vld [vmem:[#allocation2] sm:$0xff]
    %v73 = vld [vmem:[#allocation3] sm:$0xff]
    %v74 = vlog2.pop %v73
    %v75 = vmul.f32 %v74, 0.6931472
    %v76 = vadd.f32 %v72, %v75
    %v77 = vld [vmem:[#allocation4] sm:$0xff]
    %v78 = vsub.f32 %v76, %v77
    %79 = vst.msk [vmem:[%s2] sm:$0xff] %vm49, %v78
  $region17: #{tpu_custom_call.1} parent=0 // pred_fallthru
    _
  // Predicated region
  $region18: #{tpu_custom_call.1} parent=0 // pred_check
    _
  $region19: #{tpu_custom_call.1} parent=0 // pred_check_branch
    %81 = sbr.rel (0) target = $region21
  $region20: #{tpu_custom_call.1} parent=0 // pred_region
    _
  $region21: #{tpu_custom_call.1} parent=0 // pred_fallthru
    _
  // Predicated region
  $region22: #{tpu_custom_call.1} parent=0 // pred_check
    _
  $region23: #{tpu_custom_call.1} parent=0 // pred_check_branch
    %83 = sbr.rel (0) target = $region25
  $region24: #{tpu_custom_call.1} parent=0 // pred_region
    _
  $region25: #{tpu_custom_call.1} parent=0 // pred_fallthru
    _

</llo_original>
